<compile_context>
chip_gen: v6e
topology: v6e:2x2x1
jax: 0.10.0
libtpu: 0.0.40
codegen_flags: <defaults>
</compile_context>

<pallas_src>
import jax
import jax.numpy as jnp
from jax.experimental import pallas as pl
from jax.experimental.pallas import tpu as pltpu


def _round_up(x, m):
    return (x + m - 1) // m * m


def embedding_kernel(idx_ref, tbl_ref, o_ref):
    # idx_ref: [rows, F] int32 global indices (local index + per-feature row offset)
    # tbl_ref: [V_pad, E_pad] f32 block-diagonal combined embedding table
    # o_ref  : [rows, E_pad] f32 concatenated embeddings
    idx = idx_ref[...]
    rows, num_feat = idx.shape
    v_pad = tbl_ref.shape[0]

    lane = jax.lax.broadcasted_iota(jnp.int32, (rows, v_pad), 1)
    hot = jnp.zeros((rows, v_pad), jnp.float32)
    for f in range(num_feat):  # num_feat is small and static -> unrolled compares on the VPU
        hot = hot + (lane == idx[:, f:f + 1]).astype(jnp.float32)

    # Multi-hot @ block-diagonal table == per-feature gather + concat (MXU).
    o_ref[...] = jnp.dot(
        hot, tbl_ref[...],
        preferred_element_type=jnp.float32,
        precision=jax.lax.Precision.HIGHEST,
    )


def embedding_forward(categorical, emb_tables, *, row_tile=512):
    """categorical: int array [..., F]; emb_tables: list of [vocab_f, emb_f] f32 tables."""
    *batch, num_feat = categorical.shape
    assert num_feat == len(emb_tables)
    rows = 1
    for d in batch:
        rows *= d

    vocabs = [int(t.shape[0]) for t in emb_tables]
    edims = [int(t.shape[1]) for t in emb_tables]
    v_total = sum(vocabs)
    e_total = sum(edims)
    v_pad = _round_up(v_total, 128)
    e_pad = _round_up(e_total, 128)

    # Block-diagonal combined table (built once; pure parameter packing).
    tbl = jnp.zeros((v_pad, e_pad), jnp.float32)
    row_offs = []
    r0 = c0 = 0
    for t in emb_tables:
        v, e = t.shape
        tbl = tbl.at[r0:r0 + v, c0:c0 + e].set(t.astype(jnp.float32))
        row_offs.append(r0)
        r0 += v
        c0 += e

    # Global indices: local index + per-feature row offset into the combined table.
    idx = categorical.reshape(rows, num_feat).astype(jnp.int32)
    idx = idx + jnp.asarray(row_offs, jnp.int32)[None, :]

    row_tile = min(row_tile, _round_up(rows, 8))
    rows_pad = _round_up(rows, row_tile)
    if rows_pad != rows:
        # Padded rows gather row 0 of the table; they are sliced off below.
        idx = jnp.pad(idx, ((0, rows_pad - rows), (0, 0)))

    grid = (rows_pad // row_tile,)
    out = pl.pallas_call(
        embedding_kernel,
        out_shape=jax.ShapeDtypeStruct((rows_pad, e_pad), jnp.float32),
        grid_spec=pltpu.PrefetchScalarGridSpec(
            num_scalar_prefetch=0,
            grid=grid,
            in_specs=[
                pl.BlockSpec((row_tile, num_feat), lambda i: (i, 0)),  # index rows for this tile
                pl.BlockSpec((v_pad, e_pad), lambda i: (0, 0)),        # combined table, VMEM-resident
            ],
            out_specs=pl.BlockSpec((row_tile, e_pad), lambda i: (i, 0)),
        ),
        compiler_params=pltpu.CompilerParams(dimension_semantics=("parallel",)),
    )(idx, tbl)

    return out[:rows, :e_total].reshape(*batch, e_total)


def ref_forward(categorical, emb_tables):
    embs = [jnp.take(tbl, categorical[..., i], axis=0) for i, tbl in enumerate(emb_tables)]
    return jnp.concatenate(embs, axis=-1)


def init_tables(key, categorical_features):
    # nn.Embedding weights with xavier_normal_(gain=calculate_gain('relu')).
    gain = jnp.sqrt(2.0)
    tables = []
    for vocab, edim in categorical_features.values():
        key, k = jax.random.split(key)
        std = gain * jnp.sqrt(2.0 / (vocab + edim))
        tables.append(std * jax.random.normal(k, (vocab, edim), jnp.float32))
    return tables


if __name__ == "__main__":
    key = jax.random.PRNGKey(0)

    # (vocab_size, emb_dim) per categorical feature.
    categorical_features = {"cat_a": (11, 5), "cat_b": (7, 3), "cat_c": (23, 8)}  # E_total = 16
    N, L = 2, 8
    num_feat = len(categorical_features)

    key, kt = jax.random.split(key)
    emb_tables = init_tables(kt, categorical_features)

    cols = []
    for name, (vocab, _) in categorical_features.items():
        key, kc = jax.random.split(key)
        cols.append(jax.random.randint(kc, (N, L, 1), 0, vocab, jnp.int32))
    categorical = jnp.concatenate(cols, axis=-1)  # [N, L, F]

    out = embedding_forward(categorical, emb_tables)
    out = jax.block_until_ready(out)

    ref = ref_forward(categorical, emb_tables)
    e_total = sum(e for _, e in categorical_features.values())
    assert out.shape == (N, L, e_total), out.shape
    assert jnp.allclose(out, ref, atol=1e-4, rtol=1e-4), float(jnp.max(jnp.abs(out - ref)))

    print("KERNEL_OK")
</pallas_src>

<mosaic_0001>
module attributes {stable_mosaic.version = 11 : i64} {
  func.func @embedding_kernel(%arg0: i32, %arg1: memref<16x3xi32, #tpu.memory_space<vmem>>, %arg2: memref<128x128xf32, #tpu.memory_space<vmem>>, %arg3: memref<16x128xf32, #tpu.memory_space<vmem>>) attributes {dimension_semantics = [#tpu.dimension_semantics<parallel>], iteration_bounds = array<i64: 1>, scalar_prefetch = 0 : i64, scratch_operands = 0 : i64, tpu.core_type = #tpu.core_type<tc>, window_params = [{transform_indices = @transform_0, window_bounds = array<i64: 16, 3>}, {pipeline_mode = #tpu.pipeline_mode<synchronous>, transform_indices = @transform_1, window_bounds = array<i64: 128, 128>}, {transform_indices = @transform_2, window_bounds = array<i64: 16, 128>}]} {
    %c0 = arith.constant 0 : index
    %c0_0 = arith.constant 0 : index
    %0 = vector.load %arg1[%c0, %c0_0] : memref<16x3xi32, #tpu.memory_space<vmem>>, vector<16x3xi32>
    %1 = tpu.iota {dimensions = array<i32: 1>} : vector<16x128xi32>
    %cst = arith.constant 0.000000e+00 : f32
    %2 = vector.broadcast %cst : f32 to vector<16x128xf32>
    %3 = vector.extract_strided_slice %0 {offsets = [0, 0], sizes = [16, 1], strides = [1, 1]} : vector<16x3xi32> to vector<16x1xi32>
    %4 = vector.broadcast %3 : vector<16x1xi32> to vector<16x128xi32>
    %5 = arith.cmpi eq, %1, %4 : vector<16x128xi32>
    %6 = arith.extui %5 : vector<16x128xi1> to vector<16x128xi32>
    %7 = arith.sitofp %6 : vector<16x128xi32> to vector<16x128xf32>
    %8 = arith.addf %2, %7 : vector<16x128xf32>
    %9 = vector.extract_strided_slice %0 {offsets = [0, 1], sizes = [16, 1], strides = [1, 1]} : vector<16x3xi32> to vector<16x1xi32>
    %10 = vector.broadcast %9 : vector<16x1xi32> to vector<16x128xi32>
    %11 = arith.cmpi eq, %1, %10 : vector<16x128xi32>
    %12 = arith.extui %11 : vector<16x128xi1> to vector<16x128xi32>
    %13 = arith.sitofp %12 : vector<16x128xi32> to vector<16x128xf32>
    %14 = arith.addf %8, %13 : vector<16x128xf32>
    %15 = vector.extract_strided_slice %0 {offsets = [0, 2], sizes = [16, 1], strides = [1, 1]} : vector<16x3xi32> to vector<16x1xi32>
    %16 = vector.broadcast %15 : vector<16x1xi32> to vector<16x128xi32>
    %17 = arith.cmpi eq, %1, %16 : vector<16x128xi32>
    %18 = arith.extui %17 : vector<16x128xi1> to vector<16x128xi32>
    %19 = arith.sitofp %18 : vector<16x128xi32> to vector<16x128xf32>
    %20 = arith.addf %14, %19 : vector<16x128xf32>
    %c0_1 = arith.constant 0 : index
    %c0_2 = arith.constant 0 : index
    %21 = vector.load %arg2[%c0_1, %c0_2] : memref<128x128xf32, #tpu.memory_space<vmem>>, vector<128x128xf32>
    %cst_3 = arith.constant dense<0.000000e+00> : vector<16x128xf32>
    %22 = tpu.matmul %20, %21, %cst_3 {dimension_numbers = #tpu.dot_dimension_numbers<[1], [0], [0], [1], [0, 0, 1, 1], [], []>, precision = #tpu.contract_precision<fp32>} : vector<16x128xf32>, vector<128x128xf32>, vector<16x128xf32> -> vector<16x128xf32>
    %c0_4 = arith.constant 0 : index
    %c0_5 = arith.constant 0 : index
    %23 = vector.load %arg3[%c0_4, %c0_5] : memref<16x128xf32, #tpu.memory_space<vmem>>, vector<16x128xf32>
    tpu.vector_store %arg3[%c0_4, %c0_5], %22 {strides = array<i32>} : memref<16x128xf32, #tpu.memory_space<vmem>>, vector<16x128xf32>,
    return
  }
  func.func @transform_0(%arg0: i32) -> (i32, i32) {
    %c0_i32 = arith.constant 0 : i32
    %c0_i32_0 = arith.constant 0 : i32
    return %arg0, %c0_i32 : i32, i32
  }
  func.func @transform_1(%arg0: i32) -> (i32, i32) {
    %c0_i32 = arith.constant 0 : i32
    %c0_i32_0 = arith.constant 0 : i32
    %c0_i32_1 = arith.constant 0 : i32
    return %c0_i32, %c0_i32_0 : i32, i32
  }
  func.func @transform_2(%arg0: i32) -> (i32, i32) {
    %c0_i32 = arith.constant 0 : i32
    %c0_i32_0 = arith.constant 0 : i32
    return %arg0, %c0_i32 : i32, i32
  }
}

</mosaic_0001>

<llo_original>
// kernel: tpu_custom_call.1
$region0: #{tpu_custom_call.1}
  #allocation0 [shape = 'u32[]', space=smem, size = 0x4, offset = 0x4, fixed_abs, tag = 'smem constant byte address 0x4 - core index']
  #allocation1 [shape = 'u32[144,128]{1,0:T(1,128)}', space=vmem, size = 0x12000, scoped, tag = 'internal scratch']
  %s0 = inlined_call_operand.vmem [shape: s32[16,3], index: 0, kind: input, shape index: {}]
  %s1 = inlined_call_operand.hbm [shape: f32[128,128], index: 1, kind: input, shape index: {}]
  %s2 = inlined_call_operand.hbm [shape: f32[16,128], index: 2, kind: output, shape index: {}]
  %s3 = sld [smem:[#allocation0]]
  $region22: #{tpu_custom_call.1} parent=0
    _
  %s5 = ssub.s32 1, %s3
  %s6 = scalar_select 0, %s5, %s3
  $region1: #{tpu_custom_call.1} parent=0
    #allocation2 [shape = 'u8[65536]{0}', space=vmem, size = 0x10000, scoped, tag = 'input window, operand 1, single buffered']
    #allocation3 [shape = 's32[1]{0}', space=sflag, size = 0x4, scoped, tag = 'scoped memory for tpu_custom_call.1']
    #allocation4 [shape = 's32[1]{0}', space=sflag, size = 0x4, scoped, tag = 'scoped memory for tpu_custom_call.1']
    #allocation5 [shape = 'u8[8192]{0}', space=vmem, size = 0x2000, scoped, tag = 'output window, operand 0, single buffered']
    %7 = vsyncpa [#allocation3], 0
    %8 = vsyncpa [#allocation4], 0
    // Predicated region
    $region2: #{tpu_custom_call.1} parent=1 // pred_check
      _
    $region3: #{tpu_custom_call.1} parent=1 // pred_check_branch
      %10 = sbr.rel (0) target = $region5
    $region4: #{tpu_custom_call.1} parent=1 // pred_region
      _
    $region5: #{tpu_custom_call.1} parent=1 // pred_fallthru
      _
    // Predicated region
    $region6: #{tpu_custom_call.1} parent=1 // pred_check
      _
    $region7: #{tpu_custom_call.1} parent=1 // pred_check_branch
      %12 = sbr.rel (0) target = $region9
    $region8: #{tpu_custom_call.1} parent=1 // pred_region
      %s14 = ssub.s32 2048, 2048
      %15 = vsyncadd [#allocation3], %s14
      %s16 = sshll.u32 [#allocation2], 4
      %s17 = int_to_ptr.vmem [resolvable:$true] %s16
      %22 = dma.hbm_to_vmem [thread:$0]  %s1, 2048, %s17, [#allocation3], 128, 128, 8
    $region9: #{tpu_custom_call.1} parent=1 // pred_fallthru
      _
    // Predicated region
    $region10: #{tpu_custom_call.1} parent=1 // pred_check
      _
    $region11: #{tpu_custom_call.1} parent=1 // pred_check_branch
      %24 = sbr.rel (0) target = $region13
    $region12: #{tpu_custom_call.1} parent=1 // pred_region
      %25 = dma.done [#allocation3], 2048
    $region13: #{tpu_custom_call.1} parent=1 // pred_fallthru
      _
    %v26 = vld [vmem:[%s0] sm:$0xff]
    %v27 = vld [vmem:[%s0 + $0x8] sm:$0xff]
    %v28 = vlaneseq
    %v29 = vand.u32 %v28, 127
    %30 = vset.pattern.permute.xlu0 0
    %31 = vperm.xlu0 %30, %v26
    %v32 = vpop.permute.xlu0 %31
    %33 = vset.pattern.permute.xlu0 0
    %34 = vperm.xlu0 %33, %v27
    %v35 = vpop.permute.xlu0 %34
    %vm36 = vcmp.eq.s32.totalorder %v29, %v32
    %vm37 = vcmp.eq.s32.totalorder %v29, %v35
    %v38 = vsel %vm36, 1, 0
    %v39 = vsel %vm37, 1, 0
    %v40 = vcvt.s32.f32 %v38
    %v41 = vcvt.s32.f32 %v39
    %v42 = vadd.f32 %v40, 0.0
    %v43 = vadd.f32 %v41, 0.0
    %44 = vset.pattern.permute.xlu0 1
    %45 = vperm.xlu0 %44, %v26
    %v46 = vpop.permute.xlu0 %45
    %47 = vset.pattern.permute.xlu0 1
    %48 = vperm.xlu0 %47, %v27
    %v49 = vpop.permute.xlu0 %48
    %vm50 = vcmp.eq.s32.totalorder %v29, %v46
    %vm51 = vcmp.eq.s32.totalorder %v29, %v49
    %v52 = vsel %vm50, 1, 0
    %v53 = vsel %vm51, 1, 0
    %v54 = vcvt.s32.f32 %v52
    %v55 = vcvt.s32.f32 %v53
    %v56 = vadd.f32 %v42, %v54
    %v57 = vadd.f32 %v43, %v55
    %58 = vset.pattern.permute.xlu0 2
    %59 = vperm.xlu0 %58, %v26
    %v60 = vpop.permute.xlu0 %59
    %61 = vset.pattern.permute.xlu0 2
    %62 = vperm.xlu0 %61, %v27
    %v63 = vpop.permute.xlu0 %62
    %vm64 = vcmp.eq.s32.totalorder %v29, %v60
    %vm65 = vcmp.eq.s32.totalorder %v29, %v63
    %v66 = vsel %vm64, 1, 0
    %v67 = vsel %vm65, 1, 0
    %v68 = vcvt.s32.f32 %v66
    %v69 = vcvt.s32.f32 %v67
    %v70 = vadd.f32 %v56, %v68
    %v71 = vadd.f32 %v57, %v69
    %v72 = vld [vmem:[#allocation2] sm:$0xff]
    %v73 = vld [vmem:[#allocation2 + $0x8] sm:$0xff]
    %v74 = vld [vmem:[#allocation2 + $0x10] sm:$0xff]
    %v75 = vld [vmem:[#allocation2 + $0x18] sm:$0xff]
    %v76 = vld [vmem:[#allocation2 + $0x20] sm:$0xff]
    %v77 = vld [vmem:[#allocation2 + $0x28] sm:$0xff]
    %v78 = vld [vmem:[#allocation2 + $0x30] sm:$0xff]
    %v79 = vld [vmem:[#allocation2 + $0x38] sm:$0xff]
    %v80 = vld [vmem:[#allocation2 + $0x40] sm:$0xff]
    %v81 = vld [vmem:[#allocation2 + $0x48] sm:$0xff]
    %v82 = vld [vmem:[#allocation2 + $0x50] sm:$0xff]
    %v83 = vld [vmem:[#allocation2 + $0x58] sm:$0xff]
    %v84 = vld [vmem:[#allocation2 + $0x60] sm:$0xff]
    %v85 = vld [vmem:[#allocation2 + $0x68] sm:$0xff]
    %v86 = vld [vmem:[#allocation2 + $0x70] sm:$0xff]
    %v87 = vld [vmem:[#allocation2 + $0x78] sm:$0xff]
    %88 = vmatprep.subr.mxu0 0.0
    %v89 = vand.u32 %v87, 4294901760
    %90 = vmatpush1.msra.mxu0 %v89
    %91 = vmatprep.subr.mxu0 0.0
    %v92 = vand.u32 %v86, 4294901760
    %93 = vmatpush1.msra.mxu0 %v92
    %94 = vmatprep.subr.mxu0 0.0
    %v95 = vand.u32 %v85, 4294901760
    %96 = vmatpush1.msra.mxu0 %v95
    %97 = vmatprep.subr.mxu0 0.0
    %v98 = vand.u32 %v84, 4294901760
    %99 = vmatpush1.msra.mxu0 %v98
    %100 = vmatprep.subr.mxu0 0.0
    %v101 = vand.u32 %v83, 4294901760
    %102 = vmatpush1.msra.mxu0 %v101
    %103 = vmatprep.subr.mxu0 0.0
    %v104 = vand.u32 %v82, 4294901760
    %105 = vmatpush1.msra.mxu0 %v104
    %106 = vmatprep.subr.mxu0 0.0
    %v107 = vand.u32 %v81, 4294901760
    %108 = vmatpush1.msra.mxu0 %v107
    %109 = vmatprep.subr.mxu0 0.0
    %v110 = vand.u32 %v80, 4294901760
    %111 = vmatpush1.msra.mxu0 %v110
    %112 = vmatprep.subr.mxu0 0.0
    %v113 = vand.u32 %v79, 4294901760
    %114 = vmatpush1.msra.mxu0 %v113
    %115 = vmatprep.subr.mxu0 0.0
    %v116 = vand.u32 %v78, 4294901760
    %117 = vmatpush1.msra.mxu0 %v116
    %118 = vmatprep.subr.mxu0 0.0
    %v119 = vand.u32 %v77, 4294901760
    %120 = vmatpush1.msra.mxu0 %v119
    %121 = vmatprep.subr.mxu0 0.0
    %v122 = vand.u32 %v76, 4294901760
    %123 = vmatpush1.msra.mxu0 %v122
    %124 = vmatprep.subr.mxu0 0.0
    %v125 = vand.u32 %v75, 4294901760
    %126 = vmatpush1.msra.mxu0 %v125
    %127 = vmatprep.subr.mxu0 0.0
    %v128 = vand.u32 %v74, 4294901760
    %129 = vmatpush1.msra.mxu0 %v128
    %130 = vmatprep.subr.mxu0 0.0
    %v131 = vand.u32 %v73, 4294901760
    %132 = vmatpush1.msra.mxu0 %v131
    %133 = vmatprep.subr.mxu0 0.0
    %v134 = vand.u32 %v72, 4294901760
    %135 = vmatpush1.msra.mxu0 %v134
    %136 = vmatprep.subr.mxu0 0.0
    %137 = vmatpush2.msra.mxu0 0.0
    %138 = vmatprep.subr.mxu0 0.0
    %139 = vmatpush2.msra.mxu0 0.0
    %140 = vmatprep.subr.mxu0 0.0
    %141 = vmatpush2.msra.mxu0 0.0
    %142 = vmatprep.subr.mxu0 0.0
    %143 = vmatpush2.msra.mxu0 0.0
    %144 = vmatprep.subr.mxu0 0.0
    %145 = vmatpush2.msra.mxu0 0.0
    %146 = vmatprep.subr.mxu0 0.0
    %147 = vmatpush2.msra.mxu0 0.0
    %148 = vmatprep.subr.mxu0 0.0
    %149 = vmatpush2.msra.mxu0 0.0
    %150 = vmatprep.subr.mxu0 0.0
    %151 = vmatpush2.msra.mxu0 0.0
    %152 = vmatprep.subr.mxu0 0.0
    %153 = vmatpush2.msra.mxu0 0.0
    %154 = vmatprep.subr.mxu0 0.0
    %155 = vmatpush2.msra.mxu0 0.0
    %156 = vmatprep.subr.mxu0 0.0
    %157 = vmatpush2.msra.mxu0 0.0
    %158 = vmatprep.subr.mxu0 0.0
    %159 = vmatpush2.msra.mxu0 0.0
    %160 = vmatprep.subr.mxu0 0.0
    %161 = vmatpush2.msra.mxu0 0.0
    %162 = vmatprep.subr.mxu0 0.0
    %163 = vmatpush2.msra.mxu0 0.0
    %164 = vmatprep.subr.mxu0 0.0
    %165 = vmatpush2.msra.mxu0 0.0
    %166 = vmatprep.subr.mxu0 0.0
    %167 = vmatpush2.msra.mxu0 0.0
    %168 = vmatprep.mubr.f32.mxu0 0.0
    %v169 = vand.u32 %v70, 4294901760
    %v170 = vsub.f32 %v70, %v169
    %v171 = vand.u32 %v170, 4294901760
    %v172 = vsub.f32 %v170, %v171
    %v173 = vand.u32 %v172, 4294901760
    %174 = vmatmul.mubr.f32.gmra.mxu0 %v173
    %v175 = vpop.f32.mrf.mxu0
    %v176 = vadd.f32 0.0, %v175
    %v177 = vpop.f32.mrf.mxu0
    %178 = vmatprep.mubr.f32.mxu0 0.0
    %v179 = vand.u32 %v71, 4294901760
    %v180 = vsub.f32 %v71, %v179
    %v181 = vand.u32 %v180, 4294901760
    %v182 = vsub.f32 %v180, %v181
    %v183 = vand.u32 %v182, 4294901760
    %184 = vmatmul.mubr.f32.gmra.mxu0 %v183
    %v185 = vpop.f32.mrf.mxu0
    %v186 = vadd.f32 0.0, %v185
    %v187 = vpop.f32.mrf.mxu0
    %188 = vdwg.mxu0
    %189 = vmatprep.subr.mxu0 0.0
    %v190 = vand.u32 %v87, 4294901760
    %v191 = vsub.f32 %v87, %v190
    %v192 = vand.u32 %v191, 4294901760
    %v193 = vsub.f32 %v191, %v192
    %v194 = vand.u32 %v193, 4294901760
    %195 = vmatpush1.msra.mxu0 %v194
    %196 = vmatprep.subr.mxu0 0.0
    %v197 = vand.u32 %v86, 4294901760
    %v198 = vsub.f32 %v86, %v197
    %v199 = vand.u32 %v198, 4294901760
    %v200 = vsub.f32 %v198, %v199
    %v201 = vand.u32 %v200, 4294901760
    %202 = vmatpush1.msra.mxu0 %v201
    %203 = vmatprep.subr.mxu0 0.0
    %v204 = vand.u32 %v85, 4294901760
    %v205 = vsub.f32 %v85, %v204
    %v206 = vand.u32 %v205, 4294901760
    %v207 = vsub.f32 %v205, %v206
    %v208 = vand.u32 %v207, 4294901760
    %209 = vmatpush1.msra.mxu0 %v208
    %210 = vmatprep.subr.mxu0 0.0
    %v211 = vand.u32 %v84, 4294901760
    %v212 = vsub.f32 %v84, %v211
    %v213 = vand.u32 %v212, 4294901760
    %v214 = vsub.f32 %v212, %v213
    %v215 = vand.u32 %v214, 4294901760
    %216 = vmatpush1.msra.mxu0 %v215
    %217 = vmatprep.subr.mxu0 0.0
    %v218 = vand.u32 %v83, 4294901760
    %v219 = vsub.f32 %v83, %v218
    %v220 = vand.u32 %v219, 4294901760
    %v221 = vsub.f32 %v219, %v220
    %v222 = vand.u32 %v221, 4294901760
    %223 = vmatpush1.msra.mxu0 %v222
    %224 = vmatprep.subr.mxu0 0.0
    %v225 = vand.u32 %v82, 4294901760
    %v226 = vsub.f32 %v82, %v225
    %v227 = vand.u32 %v226, 4294901760
    %v228 = vsub.f32 %v226, %v227
    %v229 = vand.u32 %v228, 4294901760
    %230 = vmatpush1.msra.mxu0 %v229
    %231 = vmatprep.subr.mxu0 0.0
    %v232 = vand.u32 %v81, 4294901760
    %v233 = vsub.f32 %v81, %v232
    %v234 = vand.u32 %v233, 4294901760
    %v235 = vsub.f32 %v233, %v234
    %v236 = vand.u32 %v235, 4294901760
    %237 = vmatpush1.msra.mxu0 %v236
    %238 = vmatprep.subr.mxu0 0.0
    %v239 = vand.u32 %v80, 4294901760
    %v240 = vsub.f32 %v80, %v239
    %v241 = vand.u32 %v240, 4294901760
    %v242 = vsub.f32 %v240, %v241
    %v243 = vand.u32 %v242, 4294901760
    %244 = vmatpush1.msra.mxu0 %v243
    %245 = vmatprep.subr.mxu0 0.0
    %v246 = vand.u32 %v79, 4294901760
    %v247 = vsub.f32 %v79, %v246
    %v248 = vand.u32 %v247, 4294901760
    %v249 = vsub.f32 %v247, %v248
    %v250 = vand.u32 %v249, 4294901760
    %251 = vmatpush1.msra.mxu0 %v250
    %252 = vmatprep.subr.mxu0 0.0
    %v253 = vand.u32 %v78, 4294901760
    %v254 = vsub.f32 %v78, %v253
    %v255 = vand.u32 %v254, 4294901760
    %v256 = vsub.f32 %v254, %v255
    %v257 = vand.u32 %v256, 4294901760
    %258 = vmatpush1.msra.mxu0 %v257
    %259 = vmatprep.subr.mxu0 0.0
    %v260 = vand.u32 %v77, 4294901760
    %v261 = vsub.f32 %v77, %v260
    %v262 = vand.u32 %v261, 4294901760
    %v263 = vsub.f32 %v261, %v262
    %v264 = vand.u32 %v263, 4294901760
    %265 = vmatpush1.msra.mxu0 %v264
    %266 = vmatprep.subr.mxu0 0.0
    %v267 = vand.u32 %v76, 4294901760
    %v268 = vsub.f32 %v76, %v267
    %v269 = vand.u32 %v268, 4294901760
    %v270 = vsub.f32 %v268, %v269
    %v271 = vand.u32 %v270, 4294901760
    %272 = vmatpush1.msra.mxu0 %v271
    %273 = vmatprep.subr.mxu0 0.0
    %v274 = vand.u32 %v75, 4294901760
    %v275 = vsub.f32 %v75, %v274
    %v276 = vand.u32 %v275, 4294901760
    %v277 = vsub.f32 %v275, %v276
    %v278 = vand.u32 %v277, 4294901760
    %279 = vmatpush1.msra.mxu0 %v278
    %280 = vmatprep.subr.mxu0 0.0
    %v281 = vand.u32 %v74, 4294901760
    %v282 = vsub.f32 %v74, %v281
    %v283 = vand.u32 %v282, 4294901760
    %v284 = vsub.f32 %v282, %v283
    %v285 = vand.u32 %v284, 4294901760
    %286 = vmatpush1.msra.mxu0 %v285
    %287 = vmatprep.subr.mxu0 0.0
    %v288 = vand.u32 %v73, 4294901760
    %v289 = vsub.f32 %v73, %v288
    %v290 = vand.u32 %v289, 4294901760
    %v291 = vsub.f32 %v289, %v290
    %v292 = vand.u32 %v291, 4294901760
    %293 = vmatpush1.msra.mxu0 %v292
    %294 = vmatprep.subr.mxu0 0.0
    %v295 = vand.u32 %v72, 4294901760
    %v296 = vsub.f32 %v72, %v295
    %v297 = vand.u32 %v296, 4294901760
    %v298 = vsub.f32 %v296, %v297
    %v299 = vand.u32 %v298, 4294901760
    %300 = vmatpush1.msra.mxu0 %v299
    %301 = vmatprep.subr.mxu0 0.0
    %302 = vmatpush2.msra.mxu0 0.0
    %303 = vmatprep.subr.mxu0 0.0
    %304 = vmatpush2.msra.mxu0 0.0
    %305 = vmatprep.subr.mxu0 0.0
    %306 = vmatpush2.msra.mxu0 0.0
    %307 = vmatprep.subr.mxu0 0.0
    %308 = vmatpush2.msra.mxu0 0.0
    %309 = vmatprep.subr.mxu0 0.0
    %310 = vmatpush2.msra.mxu0 0.0
    %311 = vmatprep.subr.mxu0 0.0
    %312 = vmatpush2.msra.mxu0 0.0
    %313 = vmatprep.subr.mxu0 0.0
    %314 = vmatpush2.msra.mxu0 0.0
    %315 = vmatprep.subr.mxu0 0.0
    %316 = vmatpush2.msra.mxu0 0.0
    %317 = vmatprep.subr.mxu0 0.0
    %318 = vmatpush2.msra.mxu0 0.0
    %319 = vmatprep.subr.mxu0 0.0
    %320 = vmatpush2.msra.mxu0 0.0
    %321 = vmatprep.subr.mxu0 0.0
    %322 = vmatpush2.msra.mxu0 0.0
    %323 = vmatprep.subr.mxu0 0.0
    %324 = vmatpush2.msra.mxu0 0.0
    %325 = vmatprep.subr.mxu0 0.0
    %326 = vmatpush2.msra.mxu0 0.0
    %327 = vmatprep.subr.mxu0 0.0
    %328 = vmatpush2.msra.mxu0 0.0
    %329 = vmatprep.subr.mxu0 0.0
    %330 = vmatpush2.msra.mxu0 0.0
    %331 = vmatprep.subr.mxu0 0.0
    %332 = vmatpush2.msra.mxu0 0.0
    %333 = vmatprep.mubr.f32.mxu0 0.0
    %v334 = vand.u32 %v70, 4294901760
    %335 = vmatmul.mubr.f32.gmra.mxu0 %v334
    %v336 = vpop.f32.mrf.mxu0
    %v337 = vadd.f32 %v176, %v336
    %v338 = vpop.f32.mrf.mxu0
    %339 = vmatprep.mubr.f32.mxu0 0.0
    %v340 = vand.u32 %v71, 4294901760
    %341 = vmatmul.mubr.f32.gmra.mxu0 %v340
    %v342 = vpop.f32.mrf.mxu0
    %v343 = vadd.f32 %v186, %v342
    %v344 = vpop.f32.mrf.mxu0
    %345 = vdwg.mxu0
    %346 = vmatprep.subr.mxu0 0.0
    %v347 = vand.u32 %v87, 4294901760
    %v348 = vsub.f32 %v87, %v347
    %349 = vmatpush1.msra.mxu0 %v348
    %350 = vmatprep.subr.mxu0 0.0
    %v351 = vand.u32 %v86, 4294901760
    %v352 = vsub.f32 %v86, %v351
    %353 = vmatpush1.msra.mxu0 %v352
    %354 = vmatprep.subr.mxu0 0.0
    %v355 = vand.u32 %v85, 4294901760
    %v356 = vsub.f32 %v85, %v355
    %357 = vmatpush1.msra.mxu0 %v356
    %358 = vmatprep.subr.mxu0 0.0
    %v359 = vand.u32 %v84, 4294901760
    %v360 = vsub.f32 %v84, %v359
    %361 = vmatpush1.msra.mxu0 %v360
    %362 = vmatprep.subr.mxu0 0.0
    %v363 = vand.u32 %v83, 4294901760
    %v364 = vsub.f32 %v83, %v363
    %365 = vmatpush1.msra.mxu0 %v364
    %366 = vmatprep.subr.mxu0 0.0
    %v367 = vand.u32 %v82, 4294901760
    %v368 = vsub.f32 %v82, %v367
    %369 = vmatpush1.msra.mxu0 %v368
    %370 = vmatprep.subr.mxu0 0.0
    %v371 = vand.u32 %v81, 4294901760
    %v372 = vsub.f32 %v81, %v371
    %373 = vmatpush1.msra.mxu0 %v372
    %374 = vmatprep.subr.mxu0 0.0
    %v375 = vand.u32 %v80, 4294901760
    %v376 = vsub.f32 %v80, %v375
    %377 = vmatpush1.msra.mxu0 %v376
    %378 = vmatprep.subr.mxu0 0.0
    %v379 = vand.u32 %v79, 4294901760
    %v380 = vsub.f32 %v79, %v379
    %381 = vmatpush1.msra.mxu0 %v380
    %382 = vmatprep.subr.mxu0 0.0
    %v383 = vand.u32 %v78, 4294901760
    %v384 = vsub.f32 %v78, %v383
    %385 = vmatpush1.msra.mxu0 %v384
    %386 = vmatprep.subr.mxu0 0.0
    %v387 = vand.u32 %v77, 4294901760
    %v388 = vsub.f32 %v77, %v387
    %389 = vmatpush1.msra.mxu0 %v388
    %390 = vmatprep.subr.mxu0 0.0
    %v391 = vand.u32 %v76, 4294901760
    %v392 = vsub.f32 %v76, %v391
    %393 = vmatpush1.msra.mxu0 %v392
    %394 = vmatprep.subr.mxu0 0.0
    %v395 = vand.u32 %v75, 4294901760
    %v396 = vsub.f32 %v75, %v395
    %397 = vmatpush1.msra.mxu0 %v396
    %398 = vmatprep.subr.mxu0 0.0
    %v399 = vand.u32 %v74, 4294901760
    %v400 = vsub.f32 %v74, %v399
    %401 = vmatpush1.msra.mxu0 %v400
    %402 = vmatprep.subr.mxu0 0.0
    %v403 = vand.u32 %v73, 4294901760
    %v404 = vsub.f32 %v73, %v403
    %405 = vmatpush1.msra.mxu0 %v404
    %406 = vmatprep.subr.mxu0 0.0
    %v407 = vand.u32 %v72, 4294901760
    %v408 = vsub.f32 %v72, %v407
    %409 = vmatpush1.msra.mxu0 %v408
    %410 = vmatprep.subr.mxu0 0.0
    %411 = vmatpush2.msra.mxu0 0.0
    %412 = vmatprep.subr.mxu0 0.0
    %413 = vmatpush2.msra.mxu0 0.0
    %414 = vmatprep.subr.mxu0 0.0
    %415 = vmatpush2.msra.mxu0 0.0
    %416 = vmatprep.subr.mxu0 0.0
    %417 = vmatpush2.msra.mxu0 0.0
    %418 = vmatprep.subr.mxu0 0.0
    %419 = vmatpush2.msra.mxu0 0.0
    %420 = vmatprep.subr.mxu0 0.0
    %421 = vmatpush2.msra.mxu0 0.0
    %422 = vmatprep.subr.mxu0 0.0
    %423 = vmatpush2.msra.mxu0 0.0
    %424 = vmatprep.subr.mxu0 0.0
    %425 = vmatpush2.msra.mxu0 0.0
    %426 = vmatprep.subr.mxu0 0.0
    %427 = vmatpush2.msra.mxu0 0.0
    %428 = vmatprep.subr.mxu0 0.0
    %429 = vmatpush2.msra.mxu0 0.0
    %430 = vmatprep.subr.mxu0 0.0
    %431 = vmatpush2.msra.mxu0 0.0
    %432 = vmatprep.subr.mxu0 0.0
    %433 = vmatpush2.msra.mxu0 0.0
    %434 = vmatprep.subr.mxu0 0.0
    %435 = vmatpush2.msra.mxu0 0.0
    %436 = vmatprep.subr.mxu0 0.0
    %437 = vmatpush2.msra.mxu0 0.0
    %438 = vmatprep.subr.mxu0 0.0
    %439 = vmatpush2.msra.mxu0 0.0
    %440 = vmatprep.subr.mxu0 0.0
    %441 = vmatpush2.msra.mxu0 0.0
    %442 = vmatprep.mubr.f32.mxu0 0.0
    %v443 = vand.u32 %v70, 4294901760
    %v444 = vsub.f32 %v70, %v443
    %445 = vmatmul.mubr.f32.gmra.mxu0 %v444
    %v446 = vpop.f32.mrf.mxu0
    %v447 = vadd.f32 %v337, %v446
    %v448 = vpop.f32.mrf.mxu0
    %449 = vmatprep.mubr.f32.mxu0 0.0
    %v450 = vand.u32 %v71, 4294901760
    %v451 = vsub.f32 %v71, %v450
    %452 = vmatmul.mubr.f32.gmra.mxu0 %v451
    %v453 = vpop.f32.mrf.mxu0
    %v454 = vadd.f32 %v343, %v453
    %v455 = vpop.f32.mrf.mxu0
    %456 = vdwg.mxu0
    %457 = vmatprep.subr.mxu0 0.0
    %v458 = vand.u32 %v87, 4294901760
    %459 = vmatpush1.msra.mxu0 %v458
    %460 = vmatprep.subr.mxu0 0.0
    %v461 = vand.u32 %v86, 4294901760
    %462 = vmatpush1.msra.mxu0 %v461
    %463 = vmatprep.subr.mxu0 0.0
    %v464 = vand.u32 %v85, 4294901760
    %465 = vmatpush1.msra.mxu0 %v464
    %466 = vmatprep.subr.mxu0 0.0
    %v467 = vand.u32 %v84, 4294901760
    %468 = vmatpush1.msra.mxu0 %v467
    %469 = vmatprep.subr.mxu0 0.0
    %v470 = vand.u32 %v83, 4294901760
    %471 = vmatpush1.msra.mxu0 %v470
    %472 = vmatprep.subr.mxu0 0.0
    %v473 = vand.u32 %v82, 4294901760
    %474 = vmatpush1.msra.mxu0 %v473
    %475 = vmatprep.subr.mxu0 0.0
    %v476 = vand.u32 %v81, 4294901760
    %477 = vmatpush1.msra.mxu0 %v476
    %478 = vmatprep.subr.mxu0 0.0
    %v479 = vand.u32 %v80, 4294901760
    %480 = vmatpush1.msra.mxu0 %v479
    %481 = vmatprep.subr.mxu0 0.0
    %v482 = vand.u32 %v79, 4294901760
    %483 = vmatpush1.msra.mxu0 %v482
    %484 = vmatprep.subr.mxu0 0.0
    %v485 = vand.u32 %v78, 4294901760
    %486 = vmatpush1.msra.mxu0 %v485
    %487 = vmatprep.subr.mxu0 0.0
    %v488 = vand.u32 %v77, 4294901760
    %489 = vmatpush1.msra.mxu0 %v488
    %490 = vmatprep.subr.mxu0 0.0
    %v491 = vand.u32 %v76, 4294901760
    %492 = vmatpush1.msra.mxu0 %v491
    %493 = vmatprep.subr.mxu0 0.0
    %v494 = vand.u32 %v75, 4294901760
    %495 = vmatpush1.msra.mxu0 %v494
    %496 = vmatprep.subr.mxu0 0.0
    %v497 = vand.u32 %v74, 4294901760
    %498 = vmatpush1.msra.mxu0 %v497
    %499 = vmatprep.subr.mxu0 0.0
    %v500 = vand.u32 %v73, 4294901760
    %501 = vmatpush1.msra.mxu0 %v500
    %502 = vmatprep.subr.mxu0 0.0
    %v503 = vand.u32 %v72, 4294901760
    %504 = vmatpush1.msra.mxu0 %v503
    %505 = vmatprep.subr.mxu0 0.0
    %506 = vmatpush2.msra.mxu0 0.0
    %507 = vmatprep.subr.mxu0 0.0
    %508 = vmatpush2.msra.mxu0 0.0
    %509 = vmatprep.subr.mxu0 0.0
    %510 = vmatpush2.msra.mxu0 0.0
    %511 = vmatprep.subr.mxu0 0.0
    %512 = vmatpush2.msra.mxu0 0.0
    %513 = vmatprep.subr.mxu0 0.0
    %514 = vmatpush2.msra.mxu0 0.0
    %515 = vmatprep.subr.mxu0 0.0
    %516 = vmatpush2.msra.mxu0 0.0
    %517 = vmatprep.subr.mxu0 0.0
    %518 = vmatpush2.msra.mxu0 0.0
    %519 = vmatprep.subr.mxu0 0.0
    %520 = vmatpush2.msra.mxu0 0.0
    %521 = vmatprep.subr.mxu0 0.0
    %522 = vmatpush2.msra.mxu0 0.0
    %523 = vmatprep.subr.mxu0 0.0
    %524 = vmatpush2.msra.mxu0 0.0
    %525 = vmatprep.subr.mxu0 0.0
    %526 = vmatpush2.msra.mxu0 0.0
    %527 = vmatprep.subr.mxu0 0.0
    %528 = vmatpush2.msra.mxu0 0.0
    %529 = vmatprep.subr.mxu0 0.0
    %530 = vmatpush2.msra.mxu0 0.0
    %531 = vmatprep.subr.mxu0 0.0
    %532 = vmatpush2.msra.mxu0 0.0
    %533 = vmatprep.subr.mxu0 0.0
    %534 = vmatpush2.msra.mxu0 0.0
    %535 = vmatprep.subr.mxu0 0.0
    %536 = vmatpush2.msra.mxu0 0.0
    %537 = vmatprep.mubr.f32.mxu0 0.0
    %v538 = vand.u32 %v70, 4294901760
    %v539 = vsub.f32 %v70, %v538
    %v540 = vand.u32 %v539, 4294901760
    %541 = vmatmul.mubr.f32.gmra.mxu0 %v540
    %v542 = vpop.f32.mrf.mxu0
    %v543 = vadd.f32 %v447, %v542
    %v544 = vpop.f32.mrf.mxu0
    %545 = vmatprep.mubr.f32.mxu0 0.0
    %v546 = vand.u32 %v71, 4294901760
    %v547 = vsub.f32 %v71, %v546
    %v548 = vand.u32 %v547, 4294901760
    %549 = vmatmul.mubr.f32.gmra.mxu0 %v548
    %v550 = vpop.f32.mrf.mxu0
    %v551 = vadd.f32 %v454, %v550
    %v552 = vpop.f32.mrf.mxu0
    %553 = vdwg.mxu0
    %554 = vmatprep.subr.mxu0 0.0
    %v555 = vand.u32 %v87, 4294901760
    %v556 = vsub.f32 %v87, %v555
    %v557 = vand.u32 %v556, 4294901760
    %558 = vmatpush1.msra.mxu0 %v557
    %559 = vmatprep.subr.mxu0 0.0
    %v560 = vand.u32 %v86, 4294901760
    %v561 = vsub.f32 %v86, %v560
    %v562 = vand.u32 %v561, 4294901760
    %563 = vmatpush1.msra.mxu0 %v562
    %564 = vmatprep.subr.mxu0 0.0
    %v565 = vand.u32 %v85, 4294901760
    %v566 = vsub.f32 %v85, %v565
    %v567 = vand.u32 %v566, 4294901760
    %568 = vmatpush1.msra.mxu0 %v567
    %569 = vmatprep.subr.mxu0 0.0
    %v570 = vand.u32 %v84, 4294901760
    %v571 = vsub.f32 %v84, %v570
    %v572 = vand.u32 %v571, 4294901760
    %573 = vmatpush1.msra.mxu0 %v572
    %574 = vmatprep.subr.mxu0 0.0
    %v575 = vand.u32 %v83, 4294901760
    %v576 = vsub.f32 %v83, %v575
    %v577 = vand.u32 %v576, 4294901760
    %578 = vmatpush1.msra.mxu0 %v577
    %579 = vmatprep.subr.mxu0 0.0
    %v580 = vand.u32 %v82, 4294901760
    %v581 = vsub.f32 %v82, %v580
    %v582 = vand.u32 %v581, 4294901760
    %583 = vmatpush1.msra.mxu0 %v582
    %584 = vmatprep.subr.mxu0 0.0
    %v585 = vand.u32 %v81, 4294901760
    %v586 = vsub.f32 %v81, %v585
    %v587 = vand.u32 %v586, 4294901760
    %588 = vmatpush1.msra.mxu0 %v587
    %589 = vmatprep.subr.mxu0 0.0
    %v590 = vand.u32 %v80, 4294901760
    %v591 = vsub.f32 %v80, %v590
    %v592 = vand.u32 %v591, 4294901760
    %593 = vmatpush1.msra.mxu0 %v592
    %594 = vmatprep.subr.mxu0 0.0
    %v595 = vand.u32 %v79, 4294901760
    %v596 = vsub.f32 %v79, %v595
    %v597 = vand.u32 %v596, 4294901760
    %598 = vmatpush1.msra.mxu0 %v597
    %599 = vmatprep.subr.mxu0 0.0
    %v600 = vand.u32 %v78, 4294901760
    %v601 = vsub.f32 %v78, %v600
    %v602 = vand.u32 %v601, 4294901760
    %603 = vmatpush1.msra.mxu0 %v602
    %604 = vmatprep.subr.mxu0 0.0
    %v605 = vand.u32 %v77, 4294901760
    %v606 = vsub.f32 %v77, %v605
    %v607 = vand.u32 %v606, 4294901760
    %608 = vmatpush1.msra.mxu0 %v607
    %609 = vmatprep.subr.mxu0 0.0
    %v610 = vand.u32 %v76, 4294901760
    %v611 = vsub.f32 %v76, %v610
    %v612 = vand.u32 %v611, 4294901760
    %613 = vmatpush1.msra.mxu0 %v612
    %614 = vmatprep.subr.mxu0 0.0
    %v615 = vand.u32 %v75, 4294901760
    %v616 = vsub.f32 %v75, %v615
    %v617 = vand.u32 %v616, 4294901760
    %618 = vmatpush1.msra.mxu0 %v617
    %619 = vmatprep.subr.mxu0 0.0
    %v620 = vand.u32 %v74, 4294901760
    %v621 = vsub.f32 %v74, %v620
    %v622 = vand.u32 %v621, 4294901760
    %623 = vmatpush1.msra.mxu0 %v622
    %624 = vmatprep.subr.mxu0 0.0
    %v625 = vand.u32 %v73, 4294901760
    %v626 = vsub.f32 %v73, %v625
    %v627 = vand.u32 %v626, 4294901760
    %628 = vmatpush1.msra.mxu0 %v627
    %629 = vmatprep.subr.mxu0 0.0
    %v630 = vand.u32 %v72, 4294901760
    %v631 = vsub.f32 %v72, %v630
    %v632 = vand.u32 %v631, 4294901760
    %633 = vmatpush1.msra.mxu0 %v632
    %634 = vmatprep.subr.mxu0 0.0
    %635 = vmatpush2.msra.mxu0 0.0
    %636 = vmatprep.subr.mxu0 0.0
    %637 = vmatpush2.msra.mxu0 0.0
    %638 = vmatprep.subr.mxu0 0.0
    %639 = vmatpush2.msra.mxu0 0.0
    %640 = vmatprep.subr.mxu0 0.0
    %641 = vmatpush2.msra.mxu0 0.0
    %642 = vmatprep.subr.mxu0 0.0
    %643 = vmatpush2.msra.mxu0 0.0
    %644 = vmatprep.subr.mxu0 0.0
    %645 = vmatpush2.msra.mxu0 0.0
    %646 = vmatprep.subr.mxu0 0.0
    %647 = vmatpush2.msra.mxu0 0.0
    %648 = vmatprep.subr.mxu0 0.0
    %649 = vmatpush2.msra.mxu0 0.0
    %650 = vmatprep.subr.mxu0 0.0
    %651 = vmatpush2.msra.mxu0 0.0
    %652 = vmatprep.subr.mxu0 0.0
    %653 = vmatpush2.msra.mxu0 0.0
    %654 = vmatprep.subr.mxu0 0.0
    %655 = vmatpush2.msra.mxu0 0.0
    %656 = vmatprep.subr.mxu0 0.0
    %657 = vmatpush2.msra.mxu0 0.0
    %658 = vmatprep.subr.mxu0 0.0
    %659 = vmatpush2.msra.mxu0 0.0
    %660 = vmatprep.subr.mxu0 0.0
    %661 = vmatpush2.msra.mxu0 0.0
    %662 = vmatprep.subr.mxu0 0.0
    %663 = vmatpush2.msra.mxu0 0.0
    %664 = vmatprep.subr.mxu0 0.0
    %665 = vmatpush2.msra.mxu0 0.0
    %666 = vmatprep.mubr.f32.mxu0 0.0
    %v667 = vand.u32 %v70, 4294901760
    %668 = vmatmul.mubr.f32.gmra.mxu0 %v667
    %v669 = vpop.f32.mrf.mxu0
    %v670 = vadd.f32 %v543, %v669
    %v671 = vpop.f32.mrf.mxu0
    %672 = vmatprep.mubr.f32.mxu0 0.0
    %v673 = vand.u32 %v71, 4294901760
    %674 = vmatmul.mubr.f32.gmra.mxu0 %v673
    %v675 = vpop.f32.mrf.mxu0
    %v676 = vadd.f32 %v551, %v675
    %v677 = vpop.f32.mrf.mxu0
    %678 = vdwg.mxu0
    %679 = vmatprep.subr.mxu0 0.0
    %v680 = vand.u32 %v87, 4294901760
    %681 = vmatpush1.msra.mxu0 %v680
    %682 = vmatprep.subr.mxu0 0.0
    %v683 = vand.u32 %v86, 4294901760
    %684 = vmatpush1.msra.mxu0 %v683
    %685 = vmatprep.subr.mxu0 0.0
    %v686 = vand.u32 %v85, 4294901760
    %687 = vmatpush1.msra.mxu0 %v686
    %688 = vmatprep.subr.mxu0 0.0
    %v689 = vand.u32 %v84, 4294901760
    %690 = vmatpush1.msra.mxu0 %v689
    %691 = vmatprep.subr.mxu0 0.0
    %v692 = vand.u32 %v83, 4294901760
    %693 = vmatpush1.msra.mxu0 %v692
    %694 = vmatprep.subr.mxu0 0.0
    %v695 = vand.u32 %v82, 4294901760
    %696 = vmatpush1.msra.mxu0 %v695
    %697 = vmatprep.subr.mxu0 0.0
    %v698 = vand.u32 %v81, 4294901760
    %699 = vmatpush1.msra.mxu0 %v698
    %700 = vmatprep.subr.mxu0 0.0
    %v701 = vand.u32 %v80, 4294901760
    %702 = vmatpush1.msra.mxu0 %v701
    %703 = vmatprep.subr.mxu0 0.0
    %v704 = vand.u32 %v79, 4294901760
    %705 = vmatpush1.msra.mxu0 %v704
    %706 = vmatprep.subr.mxu0 0.0
    %v707 = vand.u32 %v78, 4294901760
    %708 = vmatpush1.msra.mxu0 %v707
    %709 = vmatprep.subr.mxu0 0.0
    %v710 = vand.u32 %v77, 4294901760
    %711 = vmatpush1.msra.mxu0 %v710
    %712 = vmatprep.subr.mxu0 0.0
    %v713 = vand.u32 %v76, 4294901760
    %714 = vmatpush1.msra.mxu0 %v713
    %715 = vmatprep.subr.mxu0 0.0
    %v716 = vand.u32 %v75, 4294901760
    %717 = vmatpush1.msra.mxu0 %v716
    %718 = vmatprep.subr.mxu0 0.0
    %v719 = vand.u32 %v74, 4294901760
    %720 = vmatpush1.msra.mxu0 %v719
    %721 = vmatprep.subr.mxu0 0.0
    %v722 = vand.u32 %v73, 4294901760
    %723 = vmatpush1.msra.mxu0 %v722
    %724 = vmatprep.subr.mxu0 0.0
    %v725 = vand.u32 %v72, 4294901760
    %726 = vmatpush1.msra.mxu0 %v725
    %727 = vmatprep.subr.mxu0 0.0
    %728 = vmatpush2.msra.mxu0 0.0
    %729 = vmatprep.subr.mxu0 0.0
    %730 = vmatpush2.msra.mxu0 0.0
    %731 = vmatprep.subr.mxu0 0.0
    %732 = vmatpush2.msra.mxu0 0.0
    %733 = vmatprep.subr.mxu0 0.0
    %734 = vmatpush2.msra.mxu0 0.0
    %735 = vmatprep.subr.mxu0 0.0
    %736 = vmatpush2.msra.mxu0 0.0
    %737 = vmatprep.subr.mxu0 0.0
    %738 = vmatpush2.msra.mxu0 0.0
    %739 = vmatprep.subr.mxu0 0.0
    %740 = vmatpush2.msra.mxu0 0.0
    %741 = vmatprep.subr.mxu0 0.0
    %742 = vmatpush2.msra.mxu0 0.0
    %743 = vmatprep.subr.mxu0 0.0
    %744 = vmatpush2.msra.mxu0 0.0
    %745 = vmatprep.subr.mxu0 0.0
    %746 = vmatpush2.msra.mxu0 0.0
    %747 = vmatprep.subr.mxu0 0.0
    %748 = vmatpush2.msra.mxu0 0.0
    %749 = vmatprep.subr.mxu0 0.0
    %750 = vmatpush2.msra.mxu0 0.0
    %751 = vmatprep.subr.mxu0 0.0
    %752 = vmatpush2.msra.mxu0 0.0
    %753 = vmatprep.subr.mxu0 0.0
    %754 = vmatpush2.msra.mxu0 0.0
    %755 = vmatprep.subr.mxu0 0.0
    %756 = vmatpush2.msra.mxu0 0.0
    %757 = vmatprep.subr.mxu0 0.0
    %758 = vmatpush2.msra.mxu0 0.0
    %759 = vmatprep.mubr.f32.mxu0 0.0
    %v760 = vand.u32 %v70, 4294901760
    %761 = vmatmul.mubr.f32.gmra.mxu0 %v760
    %v762 = vpop.f32.mrf.mxu0
    %v763 = vadd.f32 %v670, %v762
    %v764 = vpop.f32.mrf.mxu0
    %765 = vmatprep.mubr.f32.mxu0 0.0
    %v766 = vand.u32 %v71, 4294901760
    %767 = vmatmul.mubr.f32.gmra.mxu0 %v766
    %v768 = vpop.f32.mrf.mxu0
    %v769 = vadd.f32 %v676, %v768
    %v770 = vpop.f32.mrf.mxu0
    %771 = vdwg.mxu0
    %772 = vst [vmem:[#allocation5] sm:$0xff] %v763
    %773 = vst [vmem:[#allocation5 + $0x8] sm:$0xff] %v769
    // Predicated region
    $region14: #{tpu_custom_call.1} parent=1 // pred_check
      _
    $region15: #{tpu_custom_call.1} parent=1 // pred_check_branch
      %775 = sbr.rel (0) target = $region17
    $region16: #{tpu_custom_call.1} parent=1 // pred_region
      %s777 = ssub.s32 256, 256
      %778 = vsyncadd [#allocation4], %s777
      %s779 = sshll.u32 [#allocation5], 4
      %s780 = int_to_ptr.vmem [resolvable:$true] %s779
      %785 = dma.vmem_to_hbm [thread:$0]  %s780, 256, %s2, [#allocation4], 128, 128, 8
    $region17: #{tpu_custom_call.1} parent=1 // pred_fallthru
      _
    // Predicated region
    $region18: #{tpu_custom_call.1} parent=1 // pred_check
      _
    $region19: #{tpu_custom_call.1} parent=1 // pred_check_branch
      %787 = sbr.rel (0) target = $region21
    $region20: #{tpu_custom_call.1} parent=1 // pred_region
      %788 = dma.done [#allocation4], 256
    $region21: #{tpu_custom_call.1} parent=1 // pred_fallthru
      _
    %789 = vsyncpa [#allocation3], 1
    %790 = vsyncpa [#allocation4], 1

</llo_original>
